<compile_context>
chip_gen: v6e
topology: v6e:2x2x1
jax: 0.10.0
libtpu: 0.0.40
codegen_flags: <defaults>
</compile_context>

<pallas_src>
import functools

import jax
import jax.numpy as jnp
from jax import lax
from jax.experimental import pallas as pl
from jax.experimental.pallas import tpu as pltpu


def _round_up(x, m):
    return ((x + m - 1) // m) * m


# ----------------------------------------------------------------------------
# Fused kernel (one batch tile of BT rows, all S timesteps):
#   idx_ref   : (S*BT, 1)  int32   seq-major token ids for this batch tile
#   wcomb_ref : (V, 4H)    f32     table @ W_ih^T + bias, i/f/o cols pre-scaled 0.5
#   whh_ref   : (H, 4H)    f32     W_hh^T, i/f/o cols pre-scaled by 0.5
# Outputs:
#   out_ref   : (S, BT, H) f32     per-step hidden states
#   cn_ref    : (BT, H)    f32     final cell state
# Scratch:
#   gx_sc     : (S*BT, 4H) f32     hoisted input-projection gates
# ----------------------------------------------------------------------------
def encoder_kernel(idx_ref, wcomb_ref, whh_ref, out_ref, cn_ref, gx_sc,
                   *, S, BT, H, V):
    # ---- embedding lookup + input projection for ALL timesteps (one MXU op) --
    idx = idx_ref[...]                                           # (S*BT, 1)
    n = S * BT
    cols = lax.broadcasted_iota(jnp.int32, (n, V), 1)
    onehot = (idx == cols).astype(jnp.float32)                   # (n, V)
    gx_sc[...] = jnp.dot(onehot, wcomb_ref[...],
                         preferred_element_type=jnp.float32)     # (n, 4H)

    # bf16 RHS for the recurrence matmul (hoisted out of the time loop).
    whh_bf = whh_ref[...].astype(jnp.bfloat16)                   # (H, 4H)

    # ---- serial recurrence: only h_prev @ W_hh^T remains per step ------------
    def step(t, carry):
        h_prev, c_prev = carry
        g_lin = gx_sc[pl.ds(t * BT, BT), :] + jnp.dot(
            h_prev.astype(jnp.bfloat16), whh_bf,
            preferred_element_type=jnp.float32)                  # (BT, 4H)
        # sigmoid(x) = 0.5*(tanh(x/2)+1); the /2 is already folded into the
        # i/f/o weight columns, so one tanh covers all four gate bands.
        a = jnp.tanh(g_lin)                                      # (BT, 4H)
        a_i = a[:, 0 * H:1 * H]
        a_f = a[:, 1 * H:2 * H]
        a_g = a[:, 2 * H:3 * H]
        a_o = a[:, 3 * H:4 * H]
        c_new = 0.5 * ((a_f + 1.0) * c_prev + (a_i + 1.0) * a_g)
        h_new = 0.5 * (a_o + 1.0) * jnp.tanh(c_new)
        out_ref[t] = h_new
        return h_new, c_new

    h0 = jnp.zeros((BT, H), jnp.float32)
    c0 = jnp.zeros((BT, H), jnp.float32)
    unroll = S if S <= 32 else 8
    _, c_fin = lax.fori_loop(0, S, step, (h0, c0), unroll=unroll)
    cn_ref[...] = c_fin


# ----------------------------------------------------------------------------
# Parameter packing (done once, outside the hot path).
# Gate order is PyTorch's (i, f, g, o); bias and the sigmoid-as-tanh 1/2
# pre-scale are folded directly into the weight columns.
# ----------------------------------------------------------------------------
def pack_params(embedding, w_ih, w_hh, b_ih, b_hh):
    V, E = embedding.shape
    H = w_hh.shape[1]
    pre = jnp.concatenate([
        jnp.full((H,), 0.5, jnp.float32),   # i
        jnp.full((H,), 0.5, jnp.float32),   # f
        jnp.ones((H,), jnp.float32),        # g (plain tanh)
        jnp.full((H,), 0.5, jnp.float32),   # o
    ])
    bias = (b_ih + b_hh).astype(jnp.float32)                      # (4H,)
    w_comb = (embedding.astype(jnp.float32) @ w_ih.T.astype(jnp.float32)
              + bias[None, :]) * pre[None, :]                     # (V, 4H)
    whh = w_hh.T.astype(jnp.float32) * pre[None, :]               # (H, 4H)
    return {"w_comb": w_comb, "whh": whh, "H": H}


# ----------------------------------------------------------------------------
# Encoder forward: x (B, S) int -> (outputs (S,B,H), h_n (1,B,H), c_n (1,B,H))
# Matches torch: embedding -> permute(1,0,2) -> LSTM(num_layers=1, zero init).
# ----------------------------------------------------------------------------
def encoder_forward(x_int, params):
    w_comb = params["w_comb"]                                     # (V, 4H)
    whh = params["whh"]                                           # (H, 4H)
    H = params["H"]
    V = w_comb.shape[0]

    B, S = x_int.shape
    BT = 8                                   # batch tile = sublane width
    BP = _round_up(max(B, BT), BT)
    nbt = BP // BT

    # seq-major token ids, grouped per batch tile: idx[bt, t*BT + b, 0]
    idx = jnp.transpose(x_int.astype(jnp.int32), (1, 0))          # (S, B)
    idx = jnp.pad(idx, ((0, 0), (0, BP - B)))                     # (S, BP)
    idx = idx.reshape(S, nbt, BT).transpose(1, 0, 2).reshape(nbt, S * BT, 1)

    kern = functools.partial(encoder_kernel, S=S, BT=BT, H=H, V=V)
    out, c_n = pl.pallas_call(
        kern,
        grid=(nbt,),
        in_specs=[
            pl.BlockSpec((None, S * BT, 1), lambda b: (b, 0, 0)),
            pl.BlockSpec((V, 4 * H), lambda b: (0, 0)),
            pl.BlockSpec((H, 4 * H), lambda b: (0, 0)),
        ],
        out_specs=(
            pl.BlockSpec((S, BT, H), lambda b: (0, b, 0)),
            pl.BlockSpec((BT, H), lambda b: (b, 0)),
        ),
        out_shape=(
            jax.ShapeDtypeStruct((S, BP, H), jnp.float32),
            jax.ShapeDtypeStruct((BP, H), jnp.float32),
        ),
        scratch_shapes=[pltpu.VMEM((S * BT, 4 * H), jnp.float32)],
        compiler_params=pltpu.CompilerParams(
            dimension_semantics=("parallel",)),
    )(idx, w_comb, whh)

    outputs = out[:, :B, :]                  # (S, B, H)
    h_n = outputs[-1:, :, :]                 # (1, B, H) == last hidden state
    c_n = c_n[None, :B, :]                   # (1, B, H)
    return outputs, h_n, c_n


# ----------------------------------------------------------------------------
# Pure-JAX f32 reference (built from the raw PyTorch-layout weights).
# ----------------------------------------------------------------------------
def encoder_reference(x_int, embedding, w_ih, w_hh, b_ih, b_hh):
    emb = jnp.take(embedding, x_int, axis=0)                      # (B, S, E)
    emb = jnp.transpose(emb, (1, 0, 2))                           # (S, B, E)
    H = w_hh.shape[1]
    bias = b_ih + b_hh

    def step(carry, x_t):
        h, c = carry
        gates = x_t @ w_ih.T + h @ w_hh.T + bias
        i = jax.nn.sigmoid(gates[:, 0 * H:1 * H])
        f = jax.nn.sigmoid(gates[:, 1 * H:2 * H])
        g = jnp.tanh(gates[:, 2 * H:3 * H])
        o = jax.nn.sigmoid(gates[:, 3 * H:4 * H])
        c = f * c + i * g
        h = o * jnp.tanh(c)
        return (h, c), h

    B = emb.shape[1]
    h0 = jnp.zeros((B, H), jnp.float32)
    c0 = jnp.zeros((B, H), jnp.float32)
    (h_n, c_n), outs = lax.scan(step, (h0, c0), emb)
    return outs, h_n[None], c_n[None]


if __name__ == "__main__":
    # Small config consistent with Encoder(input_dim, embedding_dim, hidden_dim).
    input_dim = 32       # vocab size
    embedding_dim = 16
    hidden_dim = 32
    batch, seq = 2, 8

    key = jax.random.PRNGKey(0)
    k_emb, k_wih, k_whh, k_bih, k_bhh, k_x = jax.random.split(key, 6)

    embedding = jax.random.normal(k_emb, (input_dim, embedding_dim), jnp.float32)
    w_ih = jax.random.normal(k_wih, (4 * hidden_dim, embedding_dim), jnp.float32) * 0.1
    w_hh = jax.random.normal(k_whh, (4 * hidden_dim, hidden_dim), jnp.float32) * 0.1
    b_ih = jax.random.normal(k_bih, (4 * hidden_dim,), jnp.float32) * 0.1
    b_hh = jax.random.normal(k_bhh, (4 * hidden_dim,), jnp.float32) * 0.1

    params = pack_params(embedding, w_ih, w_hh, b_ih, b_hh)
    x = jax.random.randint(k_x, (batch, seq), 0, input_dim, dtype=jnp.int32)

    outputs, h_n, c_n = jax.block_until_ready(encoder_forward(x, params))
    ref_out, ref_h, ref_c = encoder_reference(x, embedding, w_ih, w_hh, b_ih, b_hh)

    assert outputs.shape == (seq, batch, hidden_dim)
    assert h_n.shape == (1, batch, hidden_dim)
    assert c_n.shape == (1, batch, hidden_dim)
    # bf16 MXU inputs in the recurrence -> slightly looser tolerance vs f32 ref.
    assert jnp.allclose(outputs, ref_out, atol=2e-2, rtol=2e-2)
    assert jnp.allclose(h_n, ref_h, atol=2e-2, rtol=2e-2)
    assert jnp.allclose(c_n, ref_c, atol=2e-2, rtol=2e-2)

    print("KERNEL_OK")
</pallas_src>

<mosaic_0001>
module attributes {stable_mosaic.version = 11 : i64} {
  func.func @encoder_kernel(%arg0: i32, %arg1: memref<1x64x1xi32, #tpu.memory_space<vmem>>, %arg2: memref<32x128xf32, #tpu.memory_space<vmem>>, %arg3: memref<32x128xf32, #tpu.memory_space<vmem>>, %arg4: memref<8x8x32xf32, #tpu.memory_space<vmem>>, %arg5: memref<8x32xf32, #tpu.memory_space<vmem>>, %arg6: memref<64x128xf32, #tpu.memory_space<vmem>>) attributes {dimension_semantics = [#tpu.dimension_semantics<parallel>], iteration_bounds = array<i64: 1>, scalar_prefetch = 0 : i64, scratch_operands = 1 : i64, tpu.core_type = #tpu.core_type<tc>, window_params = [{transform_indices = @transform_0, window_bounds = array<i64: 1, 64, 1>}, {pipeline_mode = #tpu.pipeline_mode<synchronous>, transform_indices = @transform_1, window_bounds = array<i64: 32, 128>}, {pipeline_mode = #tpu.pipeline_mode<synchronous>, transform_indices = @transform_2, window_bounds = array<i64: 32, 128>}, {transform_indices = @transform_3, window_bounds = array<i64: 8, 8, 32>}, {transform_indices = @transform_4, window_bounds = array<i64: 8, 32>}]} {
    %c0 = arith.constant 0 : index
    %c0_0 = arith.constant 0 : index
    %c0_1 = arith.constant 0 : index
    %0 = vector.load %arg1[%c0, %c0_0, %c0_1] : memref<1x64x1xi32, #tpu.memory_space<vmem>>, vector<1x64x1xi32>
    %1 = vector.shape_cast %0 : vector<1x64x1xi32> to vector<64x1xi32>
    %2 = tpu.iota {dimensions = array<i32: 1>} : vector<64x32xi32>
    %3 = vector.broadcast %1 : vector<64x1xi32> to vector<64x32xi32>
    %4 = arith.cmpi eq, %3, %2 : vector<64x32xi32>
    %5 = arith.extui %4 : vector<64x32xi1> to vector<64x32xi32>
    %6 = arith.sitofp %5 : vector<64x32xi32> to vector<64x32xf32>
    %c0_2 = arith.constant 0 : index
    %c0_3 = arith.constant 0 : index
    %7 = vector.load %arg2[%c0_2, %c0_3] : memref<32x128xf32, #tpu.memory_space<vmem>>, vector<32x128xf32>
    %cst = arith.constant dense<0.000000e+00> : vector<64x128xf32>
    %8 = tpu.matmul %6, %7, %cst {dimension_numbers = #tpu.dot_dimension_numbers<[1], [0], [0], [1], [0, 0, 1, 1], [], []>} : vector<64x32xf32>, vector<32x128xf32>, vector<64x128xf32> -> vector<64x128xf32>
    %c0_4 = arith.constant 0 : index
    %c0_5 = arith.constant 0 : index
    %9 = vector.load %arg6[%c0_4, %c0_5] : memref<64x128xf32, #tpu.memory_space<vmem>>, vector<64x128xf32>
    tpu.vector_store %arg6[%c0_4, %c0_5], %8 {strides = array<i32>} : memref<64x128xf32, #tpu.memory_space<vmem>>, vector<64x128xf32>,
    %c0_6 = arith.constant 0 : index
    %c0_7 = arith.constant 0 : index
    %10 = vector.load %arg3[%c0_6, %c0_7] : memref<32x128xf32, #tpu.memory_space<vmem>>, vector<32x128xf32>
    %11 = arith.truncf %10 : vector<32x128xf32> to vector<32x128xbf16>
    %cst_8 = arith.constant 0.000000e+00 : f32
    %12 = vector.broadcast %cst_8 : f32 to vector<8x32xf32>
    %cst_9 = arith.constant 0.000000e+00 : f32
    %13 = vector.broadcast %cst_9 : f32 to vector<8x32xf32>
    %c0_i32 = arith.constant 0 : i32
    %c8_i32 = arith.constant 8 : i32
    %14 = arith.muli %c0_i32, %c8_i32 : i32
    %15 = arith.index_cast %14 : i32 to index
    %c0_10 = arith.constant 0 : index
    %16 = vector.load %arg6[%15, %c0_10] : memref<64x128xf32, #tpu.memory_space<vmem>>, vector<8x128xf32>
    %17 = arith.truncf %12 : vector<8x32xf32> to vector<8x32xbf16>
    %cst_11 = arith.constant dense<0.000000e+00> : vector<8x128xf32>
    %18 = tpu.matmul %17, %11, %cst_11 {dimension_numbers = #tpu.dot_dimension_numbers<[1], [0], [0], [1], [0, 0, 1, 1], [], []>} : vector<8x32xbf16>, vector<32x128xbf16>, vector<8x128xf32> -> vector<8x128xf32>
    %19 = arith.addf %16, %18 : vector<8x128xf32>
    %20 = math.tanh %19 : vector<8x128xf32>
    %21 = vector.extract_strided_slice %20 {offsets = [0, 0], sizes = [8, 32], strides = [1, 1]} : vector<8x128xf32> to vector<8x32xf32>
    %22 = vector.extract_strided_slice %20 {offsets = [0, 32], sizes = [8, 32], strides = [1, 1]} : vector<8x128xf32> to vector<8x32xf32>
    %23 = vector.extract_strided_slice %20 {offsets = [0, 64], sizes = [8, 32], strides = [1, 1]} : vector<8x128xf32> to vector<8x32xf32>
    %24 = vector.extract_strided_slice %20 {offsets = [0, 96], sizes = [8, 32], strides = [1, 1]} : vector<8x128xf32> to vector<8x32xf32>
    %cst_12 = arith.constant 1.000000e+00 : f32
    %25 = vector.broadcast %cst_12 : f32 to vector<8x32xf32>
    %26 = arith.addf %22, %25 : vector<8x32xf32>
    %27 = arith.mulf %26, %13 : vector<8x32xf32>
    %cst_13 = arith.constant 1.000000e+00 : f32
    %28 = vector.broadcast %cst_13 : f32 to vector<8x32xf32>
    %29 = arith.addf %21, %28 : vector<8x32xf32>
    %30 = arith.mulf %29, %23 : vector<8x32xf32>
    %31 = arith.addf %27, %30 : vector<8x32xf32>
    %cst_14 = arith.constant 5.000000e-01 : f32
    %32 = vector.broadcast %cst_14 : f32 to vector<8x32xf32>
    %33 = arith.mulf %32, %31 : vector<8x32xf32>
    %cst_15 = arith.constant 1.000000e+00 : f32
    %34 = vector.broadcast %cst_15 : f32 to vector<8x32xf32>
    %35 = arith.addf %24, %34 : vector<8x32xf32>
    %cst_16 = arith.constant 5.000000e-01 : f32
    %36 = vector.broadcast %cst_16 : f32 to vector<8x32xf32>
    %37 = arith.mulf %36, %35 : vector<8x32xf32>
    %38 = math.tanh %33 : vector<8x32xf32>
    %39 = arith.mulf %37, %38 : vector<8x32xf32>
    %40 = arith.index_cast %c0_i32 : i32 to index
    %c0_17 = arith.constant 0 : index
    %c0_18 = arith.constant 0 : index
    %41 = vector.load %arg4[%40, %c0_17, %c0_18] : memref<8x8x32xf32, #tpu.memory_space<vmem>>, vector<1x8x32xf32>
    %42 = vector.shape_cast %41 : vector<1x8x32xf32> to vector<8x32xf32>
    %43 = vector.shape_cast %39 : vector<8x32xf32> to vector<1x8x32xf32>
    tpu.vector_store %arg4[%40, %c0_17, %c0_18], %43 {strides = array<i32>} : memref<8x8x32xf32, #tpu.memory_space<vmem>>, vector<1x8x32xf32>,
    %c1_i32 = arith.constant 1 : i32
    %c8_i32_19 = arith.constant 8 : i32
    %44 = arith.muli %c1_i32, %c8_i32_19 : i32
    %45 = arith.index_cast %44 : i32 to index
    %c0_20 = arith.constant 0 : index
    %46 = vector.load %arg6[%45, %c0_20] : memref<64x128xf32, #tpu.memory_space<vmem>>, vector<8x128xf32>
    %47 = arith.truncf %39 : vector<8x32xf32> to vector<8x32xbf16>
    %cst_21 = arith.constant dense<0.000000e+00> : vector<8x128xf32>
    %48 = tpu.matmul %47, %11, %cst_21 {dimension_numbers = #tpu.dot_dimension_numbers<[1], [0], [0], [1], [0, 0, 1, 1], [], []>} : vector<8x32xbf16>, vector<32x128xbf16>, vector<8x128xf32> -> vector<8x128xf32>
    %49 = arith.addf %46, %48 : vector<8x128xf32>
    %50 = math.tanh %49 : vector<8x128xf32>
    %51 = vector.extract_strided_slice %50 {offsets = [0, 0], sizes = [8, 32], strides = [1, 1]} : vector<8x128xf32> to vector<8x32xf32>
    %52 = vector.extract_strided_slice %50 {offsets = [0, 32], sizes = [8, 32], strides = [1, 1]} : vector<8x128xf32> to vector<8x32xf32>
    %53 = vector.extract_strided_slice %50 {offsets = [0, 64], sizes = [8, 32], strides = [1, 1]} : vector<8x128xf32> to vector<8x32xf32>
    %54 = vector.extract_strided_slice %50 {offsets = [0, 96], sizes = [8, 32], strides = [1, 1]} : vector<8x128xf32> to vector<8x32xf32>
    %cst_22 = arith.constant 1.000000e+00 : f32
    %55 = vector.broadcast %cst_22 : f32 to vector<8x32xf32>
    %56 = arith.addf %52, %55 : vector<8x32xf32>
    %57 = arith.mulf %56, %33 : vector<8x32xf32>
    %cst_23 = arith.constant 1.000000e+00 : f32
    %58 = vector.broadcast %cst_23 : f32 to vector<8x32xf32>
    %59 = arith.addf %51, %58 : vector<8x32xf32>
    %60 = arith.mulf %59, %53 : vector<8x32xf32>
    %61 = arith.addf %57, %60 : vector<8x32xf32>
    %cst_24 = arith.constant 5.000000e-01 : f32
    %62 = vector.broadcast %cst_24 : f32 to vector<8x32xf32>
    %63 = arith.mulf %62, %61 : vector<8x32xf32>
    %cst_25 = arith.constant 1.000000e+00 : f32
    %64 = vector.broadcast %cst_25 : f32 to vector<8x32xf32>
    %65 = arith.addf %54, %64 : vector<8x32xf32>
    %cst_26 = arith.constant 5.000000e-01 : f32
    %66 = vector.broadcast %cst_26 : f32 to vector<8x32xf32>
    %67 = arith.mulf %66, %65 : vector<8x32xf32>
    %68 = math.tanh %63 : vector<8x32xf32>
    %69 = arith.mulf %67, %68 : vector<8x32xf32>
    %70 = arith.index_cast %c1_i32 : i32 to index
    %c0_27 = arith.constant 0 : index
    %c0_28 = arith.constant 0 : index
    %71 = vector.load %arg4[%70, %c0_27, %c0_28] : memref<8x8x32xf32, #tpu.memory_space<vmem>>, vector<1x8x32xf32>
    %72 = vector.shape_cast %71 : vector<1x8x32xf32> to vector<8x32xf32>
    %73 = vector.shape_cast %69 : vector<8x32xf32> to vector<1x8x32xf32>
    tpu.vector_store %arg4[%70, %c0_27, %c0_28], %73 {strides = array<i32>} : memref<8x8x32xf32, #tpu.memory_space<vmem>>, vector<1x8x32xf32>,
    %c2_i32 = arith.constant 2 : i32
    %c8_i32_29 = arith.constant 8 : i32
    %74 = arith.muli %c2_i32, %c8_i32_29 : i32
    %75 = arith.index_cast %74 : i32 to index
    %c0_30 = arith.constant 0 : index
    %76 = vector.load %arg6[%75, %c0_30] : memref<64x128xf32, #tpu.memory_space<vmem>>, vector<8x128xf32>
    %77 = arith.truncf %69 : vector<8x32xf32> to vector<8x32xbf16>
    %cst_31 = arith.constant dense<0.000000e+00> : vector<8x128xf32>
    %78 = tpu.matmul %77, %11, %cst_31 {dimension_numbers = #tpu.dot_dimension_numbers<[1], [0], [0], [1], [0, 0, 1, 1], [], []>} : vector<8x32xbf16>, vector<32x128xbf16>, vector<8x128xf32> -> vector<8x128xf32>
    %79 = arith.addf %76, %78 : vector<8x128xf32>
    %80 = math.tanh %79 : vector<8x128xf32>
    %81 = vector.extract_strided_slice %80 {offsets = [0, 0], sizes = [8, 32], strides = [1, 1]} : vector<8x128xf32> to vector<8x32xf32>
    %82 = vector.extract_strided_slice %80 {offsets = [0, 32], sizes = [8, 32], strides = [1, 1]} : vector<8x128xf32> to vector<8x32xf32>
    %83 = vector.extract_strided_slice %80 {offsets = [0, 64], sizes = [8, 32], strides = [1, 1]} : vector<8x128xf32> to vector<8x32xf32>
    %84 = vector.extract_strided_slice %80 {offsets = [0, 96], sizes = [8, 32], strides = [1, 1]} : vector<8x128xf32> to vector<8x32xf32>
    %cst_32 = arith.constant 1.000000e+00 : f32
    %85 = vector.broadcast %cst_32 : f32 to vector<8x32xf32>
    %86 = arith.addf %82, %85 : vector<8x32xf32>
    %87 = arith.mulf %86, %63 : vector<8x32xf32>
    %cst_33 = arith.constant 1.000000e+00 : f32
    %88 = vector.broadcast %cst_33 : f32 to vector<8x32xf32>
    %89 = arith.addf %81, %88 : vector<8x32xf32>
    %90 = arith.mulf %89, %83 : vector<8x32xf32>
    %91 = arith.addf %87, %90 : vector<8x32xf32>
    %cst_34 = arith.constant 5.000000e-01 : f32
    %92 = vector.broadcast %cst_34 : f32 to vector<8x32xf32>
    %93 = arith.mulf %92, %91 : vector<8x32xf32>
    %cst_35 = arith.constant 1.000000e+00 : f32
    %94 = vector.broadcast %cst_35 : f32 to vector<8x32xf32>
    %95 = arith.addf %84, %94 : vector<8x32xf32>
    %cst_36 = arith.constant 5.000000e-01 : f32
    %96 = vector.broadcast %cst_36 : f32 to vector<8x32xf32>
    %97 = arith.mulf %96, %95 : vector<8x32xf32>
    %98 = math.tanh %93 : vector<8x32xf32>
    %99 = arith.mulf %97, %98 : vector<8x32xf32>
    %100 = arith.index_cast %c2_i32 : i32 to index
    %c0_37 = arith.constant 0 : index
    %c0_38 = arith.constant 0 : index
    %101 = vector.load %arg4[%100, %c0_37, %c0_38] : memref<8x8x32xf32, #tpu.memory_space<vmem>>, vector<1x8x32xf32>
    %102 = vector.shape_cast %101 : vector<1x8x32xf32> to vector<8x32xf32>
    %103 = vector.shape_cast %99 : vector<8x32xf32> to vector<1x8x32xf32>
    tpu.vector_store %arg4[%100, %c0_37, %c0_38], %103 {strides = array<i32>} : memref<8x8x32xf32, #tpu.memory_space<vmem>>, vector<1x8x32xf32>,
    %c3_i32 = arith.constant 3 : i32
    %c8_i32_39 = arith.constant 8 : i32
    %104 = arith.muli %c3_i32, %c8_i32_39 : i32
    %105 = arith.index_cast %104 : i32 to index
    %c0_40 = arith.constant 0 : index
    %106 = vector.load %arg6[%105, %c0_40] : memref<64x128xf32, #tpu.memory_space<vmem>>, vector<8x128xf32>
    %107 = arith.truncf %99 : vector<8x32xf32> to vector<8x32xbf16>
    %cst_41 = arith.constant dense<0.000000e+00> : vector<8x128xf32>
    %108 = tpu.matmul %107, %11, %cst_41 {dimension_numbers = #tpu.dot_dimension_numbers<[1], [0], [0], [1], [0, 0, 1, 1], [], []>} : vector<8x32xbf16>, vector<32x128xbf16>, vector<8x128xf32> -> vector<8x128xf32>
    %109 = arith.addf %106, %108 : vector<8x128xf32>
    %110 = math.tanh %109 : vector<8x128xf32>
    %111 = vector.extract_strided_slice %110 {offsets = [0, 0], sizes = [8, 32], strides = [1, 1]} : vector<8x128xf32> to vector<8x32xf32>
    %112 = vector.extract_strided_slice %110 {offsets = [0, 32], sizes = [8, 32], strides = [1, 1]} : vector<8x128xf32> to vector<8x32xf32>
    %113 = vector.extract_strided_slice %110 {offsets = [0, 64], sizes = [8, 32], strides = [1, 1]} : vector<8x128xf32> to vector<8x32xf32>
    %114 = vector.extract_strided_slice %110 {offsets = [0, 96], sizes = [8, 32], strides = [1, 1]} : vector<8x128xf32> to vector<8x32xf32>
    %cst_42 = arith.constant 1.000000e+00 : f32
    %115 = vector.broadcast %cst_42 : f32 to vector<8x32xf32>
    %116 = arith.addf %112, %115 : vector<8x32xf32>
    %117 = arith.mulf %116, %93 : vector<8x32xf32>
    %cst_43 = arith.constant 1.000000e+00 : f32
    %118 = vector.broadcast %cst_43 : f32 to vector<8x32xf32>
    %119 = arith.addf %111, %118 : vector<8x32xf32>
    %120 = arith.mulf %119, %113 : vector<8x32xf32>
    %121 = arith.addf %117, %120 : vector<8x32xf32>
    %cst_44 = arith.constant 5.000000e-01 : f32
    %122 = vector.broadcast %cst_44 : f32 to vector<8x32xf32>
    %123 = arith.mulf %122, %121 : vector<8x32xf32>
    %cst_45 = arith.constant 1.000000e+00 : f32
    %124 = vector.broadcast %cst_45 : f32 to vector<8x32xf32>
    %125 = arith.addf %114, %124 : vector<8x32xf32>
    %cst_46 = arith.constant 5.000000e-01 : f32
    %126 = vector.broadcast %cst_46 : f32 to vector<8x32xf32>
    %127 = arith.mulf %126, %125 : vector<8x32xf32>
    %128 = math.tanh %123 : vector<8x32xf32>
    %129 = arith.mulf %127, %128 : vector<8x32xf32>
    %130 = arith.index_cast %c3_i32 : i32 to index
    %c0_47 = arith.constant 0 : index
    %c0_48 = arith.constant 0 : index
    %131 = vector.load %arg4[%130, %c0_47, %c0_48] : memref<8x8x32xf32, #tpu.memory_space<vmem>>, vector<1x8x32xf32>
    %132 = vector.shape_cast %131 : vector<1x8x32xf32> to vector<8x32xf32>
    %133 = vector.shape_cast %129 : vector<8x32xf32> to vector<1x8x32xf32>
    tpu.vector_store %arg4[%130, %c0_47, %c0_48], %133 {strides = array<i32>} : memref<8x8x32xf32, #tpu.memory_space<vmem>>, vector<1x8x32xf32>,
    %c4_i32 = arith.constant 4 : i32
    %c8_i32_49 = arith.constant 8 : i32
    %134 = arith.muli %c4_i32, %c8_i32_49 : i32
    %135 = arith.index_cast %134 : i32 to index
    %c0_50 = arith.constant 0 : index
    %136 = vector.load %arg6[%135, %c0_50] : memref<64x128xf32, #tpu.memory_space<vmem>>, vector<8x128xf32>
    %137 = arith.truncf %129 : vector<8x32xf32> to vector<8x32xbf16>
    %cst_51 = arith.constant dense<0.000000e+00> : vector<8x128xf32>
    %138 = tpu.matmul %137, %11, %cst_51 {dimension_numbers = #tpu.dot_dimension_numbers<[1], [0], [0], [1], [0, 0, 1, 1], [], []>} : vector<8x32xbf16>, vector<32x128xbf16>, vector<8x128xf32> -> vector<8x128xf32>
    %139 = arith.addf %136, %138 : vector<8x128xf32>
    %140 = math.tanh %139 : vector<8x128xf32>
    %141 = vector.extract_strided_slice %140 {offsets = [0, 0], sizes = [8, 32], strides = [1, 1]} : vector<8x128xf32> to vector<8x32xf32>
    %142 = vector.extract_strided_slice %140 {offsets = [0, 32], sizes = [8, 32], strides = [1, 1]} : vector<8x128xf32> to vector<8x32xf32>
    %143 = vector.extract_strided_slice %140 {offsets = [0, 64], sizes = [8, 32], strides = [1, 1]} : vector<8x128xf32> to vector<8x32xf32>
    %144 = vector.extract_strided_slice %140 {offsets = [0, 96], sizes = [8, 32], strides = [1, 1]} : vector<8x128xf32> to vector<8x32xf32>
    %cst_52 = arith.constant 1.000000e+00 : f32
    %145 = vector.broadcast %cst_52 : f32 to vector<8x32xf32>
    %146 = arith.addf %142, %145 : vector<8x32xf32>
    %147 = arith.mulf %146, %123 : vector<8x32xf32>
    %cst_53 = arith.constant 1.000000e+00 : f32
    %148 = vector.broadcast %cst_53 : f32 to vector<8x32xf32>
    %149 = arith.addf %141, %148 : vector<8x32xf32>
    %150 = arith.mulf %149, %143 : vector<8x32xf32>
    %151 = arith.addf %147, %150 : vector<8x32xf32>
    %cst_54 = arith.constant 5.000000e-01 : f32
    %152 = vector.broadcast %cst_54 : f32 to vector<8x32xf32>
    %153 = arith.mulf %152, %151 : vector<8x32xf32>
    %cst_55 = arith.constant 1.000000e+00 : f32
    %154 = vector.broadcast %cst_55 : f32 to vector<8x32xf32>
    %155 = arith.addf %144, %154 : vector<8x32xf32>
    %cst_56 = arith.constant 5.000000e-01 : f32
    %156 = vector.broadcast %cst_56 : f32 to vector<8x32xf32>
    %157 = arith.mulf %156, %155 : vector<8x32xf32>
    %158 = math.tanh %153 : vector<8x32xf32>
    %159 = arith.mulf %157, %158 : vector<8x32xf32>
    %160 = arith.index_cast %c4_i32 : i32 to index
    %c0_57 = arith.constant 0 : index
    %c0_58 = arith.constant 0 : index
    %161 = vector.load %arg4[%160, %c0_57, %c0_58] : memref<8x8x32xf32, #tpu.memory_space<vmem>>, vector<1x8x32xf32>
    %162 = vector.shape_cast %161 : vector<1x8x32xf32> to vector<8x32xf32>
    %163 = vector.shape_cast %159 : vector<8x32xf32> to vector<1x8x32xf32>
    tpu.vector_store %arg4[%160, %c0_57, %c0_58], %163 {strides = array<i32>} : memref<8x8x32xf32, #tpu.memory_space<vmem>>, vector<1x8x32xf32>,
    %c5_i32 = arith.constant 5 : i32
    %c8_i32_59 = arith.constant 8 : i32
    %164 = arith.muli %c5_i32, %c8_i32_59 : i32
    %165 = arith.index_cast %164 : i32 to index
    %c0_60 = arith.constant 0 : index
    %166 = vector.load %arg6[%165, %c0_60] : memref<64x128xf32, #tpu.memory_space<vmem>>, vector<8x128xf32>
    %167 = arith.truncf %159 : vector<8x32xf32> to vector<8x32xbf16>
    %cst_61 = arith.constant dense<0.000000e+00> : vector<8x128xf32>
    %168 = tpu.matmul %167, %11, %cst_61 {dimension_numbers = #tpu.dot_dimension_numbers<[1], [0], [0], [1], [0, 0, 1, 1], [], []>} : vector<8x32xbf16>, vector<32x128xbf16>, vector<8x128xf32> -> vector<8x128xf32>
    %169 = arith.addf %166, %168 : vector<8x128xf32>
    %170 = math.tanh %169 : vector<8x128xf32>
    %171 = vector.extract_strided_slice %170 {offsets = [0, 0], sizes = [8, 32], strides = [1, 1]} : vector<8x128xf32> to vector<8x32xf32>
    %172 = vector.extract_strided_slice %170 {offsets = [0, 32], sizes = [8, 32], strides = [1, 1]} : vector<8x128xf32> to vector<8x32xf32>
    %173 = vector.extract_strided_slice %170 {offsets = [0, 64], sizes = [8, 32], strides = [1, 1]} : vector<8x128xf32> to vector<8x32xf32>
    %174 = vector.extract_strided_slice %170 {offsets = [0, 96], sizes = [8, 32], strides = [1, 1]} : vector<8x128xf32> to vector<8x32xf32>
    %cst_62 = arith.constant 1.000000e+00 : f32
    %175 = vector.broadcast %cst_62 : f32 to vector<8x32xf32>
    %176 = arith.addf %172, %175 : vector<8x32xf32>
    %177 = arith.mulf %176, %153 : vector<8x32xf32>
    %cst_63 = arith.constant 1.000000e+00 : f32
    %178 = vector.broadcast %cst_63 : f32 to vector<8x32xf32>
    %179 = arith.addf %171, %178 : vector<8x32xf32>
    %180 = arith.mulf %179, %173 : vector<8x32xf32>
    %181 = arith.addf %177, %180 : vector<8x32xf32>
    %cst_64 = arith.constant 5.000000e-01 : f32
    %182 = vector.broadcast %cst_64 : f32 to vector<8x32xf32>
    %183 = arith.mulf %182, %181 : vector<8x32xf32>
    %cst_65 = arith.constant 1.000000e+00 : f32
    %184 = vector.broadcast %cst_65 : f32 to vector<8x32xf32>
    %185 = arith.addf %174, %184 : vector<8x32xf32>
    %cst_66 = arith.constant 5.000000e-01 : f32
    %186 = vector.broadcast %cst_66 : f32 to vector<8x32xf32>
    %187 = arith.mulf %186, %185 : vector<8x32xf32>
    %188 = math.tanh %183 : vector<8x32xf32>
    %189 = arith.mulf %187, %188 : vector<8x32xf32>
    %190 = arith.index_cast %c5_i32 : i32 to index
    %c0_67 = arith.constant 0 : index
    %c0_68 = arith.constant 0 : index
    %191 = vector.load %arg4[%190, %c0_67, %c0_68] : memref<8x8x32xf32, #tpu.memory_space<vmem>>, vector<1x8x32xf32>
    %192 = vector.shape_cast %191 : vector<1x8x32xf32> to vector<8x32xf32>
    %193 = vector.shape_cast %189 : vector<8x32xf32> to vector<1x8x32xf32>
    tpu.vector_store %arg4[%190, %c0_67, %c0_68], %193 {strides = array<i32>} : memref<8x8x32xf32, #tpu.memory_space<vmem>>, vector<1x8x32xf32>,
    %c6_i32 = arith.constant 6 : i32
    %c8_i32_69 = arith.constant 8 : i32
    %194 = arith.muli %c6_i32, %c8_i32_69 : i32
    %195 = arith.index_cast %194 : i32 to index
    %c0_70 = arith.constant 0 : index
    %196 = vector.load %arg6[%195, %c0_70] : memref<64x128xf32, #tpu.memory_space<vmem>>, vector<8x128xf32>
    %197 = arith.truncf %189 : vector<8x32xf32> to vector<8x32xbf16>
    %cst_71 = arith.constant dense<0.000000e+00> : vector<8x128xf32>
    %198 = tpu.matmul %197, %11, %cst_71 {dimension_numbers = #tpu.dot_dimension_numbers<[1], [0], [0], [1], [0, 0, 1, 1], [], []>} : vector<8x32xbf16>, vector<32x128xbf16>, vector<8x128xf32> -> vector<8x128xf32>
    %199 = arith.addf %196, %198 : vector<8x128xf32>
    %200 = math.tanh %199 : vector<8x128xf32>
    %201 = vector.extract_strided_slice %200 {offsets = [0, 0], sizes = [8, 32], strides = [1, 1]} : vector<8x128xf32> to vector<8x32xf32>
    %202 = vector.extract_strided_slice %200 {offsets = [0, 32], sizes = [8, 32], strides = [1, 1]} : vector<8x128xf32> to vector<8x32xf32>
    %203 = vector.extract_strided_slice %200 {offsets = [0, 64], sizes = [8, 32], strides = [1, 1]} : vector<8x128xf32> to vector<8x32xf32>
    %204 = vector.extract_strided_slice %200 {offsets = [0, 96], sizes = [8, 32], strides = [1, 1]} : vector<8x128xf32> to vector<8x32xf32>
    %cst_72 = arith.constant 1.000000e+00 : f32
    %205 = vector.broadcast %cst_72 : f32 to vector<8x32xf32>
    %206 = arith.addf %202, %205 : vector<8x32xf32>
    %207 = arith.mulf %206, %183 : vector<8x32xf32>
    %cst_73 = arith.constant 1.000000e+00 : f32
    %208 = vector.broadcast %cst_73 : f32 to vector<8x32xf32>
    %209 = arith.addf %201, %208 : vector<8x32xf32>
    %210 = arith.mulf %209, %203 : vector<8x32xf32>
    %211 = arith.addf %207, %210 : vector<8x32xf32>
    %cst_74 = arith.constant 5.000000e-01 : f32
    %212 = vector.broadcast %cst_74 : f32 to vector<8x32xf32>
    %213 = arith.mulf %212, %211 : vector<8x32xf32>
    %cst_75 = arith.constant 1.000000e+00 : f32
    %214 = vector.broadcast %cst_75 : f32 to vector<8x32xf32>
    %215 = arith.addf %204, %214 : vector<8x32xf32>
    %cst_76 = arith.constant 5.000000e-01 : f32
    %216 = vector.broadcast %cst_76 : f32 to vector<8x32xf32>
    %217 = arith.mulf %216, %215 : vector<8x32xf32>
    %218 = math.tanh %213 : vector<8x32xf32>
    %219 = arith.mulf %217, %218 : vector<8x32xf32>
    %220 = arith.index_cast %c6_i32 : i32 to index
    %c0_77 = arith.constant 0 : index
    %c0_78 = arith.constant 0 : index
    %221 = vector.load %arg4[%220, %c0_77, %c0_78] : memref<8x8x32xf32, #tpu.memory_space<vmem>>, vector<1x8x32xf32>
    %222 = vector.shape_cast %221 : vector<1x8x32xf32> to vector<8x32xf32>
    %223 = vector.shape_cast %219 : vector<8x32xf32> to vector<1x8x32xf32>
    tpu.vector_store %arg4[%220, %c0_77, %c0_78], %223 {strides = array<i32>} : memref<8x8x32xf32, #tpu.memory_space<vmem>>, vector<1x8x32xf32>,
    %c7_i32 = arith.constant 7 : i32
    %c8_i32_79 = arith.constant 8 : i32
    %224 = arith.muli %c7_i32, %c8_i32_79 : i32
    %225 = arith.index_cast %224 : i32 to index
    %c0_80 = arith.constant 0 : index
    %226 = vector.load %arg6[%225, %c0_80] : memref<64x128xf32, #tpu.memory_space<vmem>>, vector<8x128xf32>
    %227 = arith.truncf %219 : vector<8x32xf32> to vector<8x32xbf16>
    %cst_81 = arith.constant dense<0.000000e+00> : vector<8x128xf32>
    %228 = tpu.matmul %227, %11, %cst_81 {dimension_numbers = #tpu.dot_dimension_numbers<[1], [0], [0], [1], [0, 0, 1, 1], [], []>} : vector<8x32xbf16>, vector<32x128xbf16>, vector<8x128xf32> -> vector<8x128xf32>
    %229 = arith.addf %226, %228 : vector<8x128xf32>
    %230 = math.tanh %229 : vector<8x128xf32>
    %231 = vector.extract_strided_slice %230 {offsets = [0, 0], sizes = [8, 32], strides = [1, 1]} : vector<8x128xf32> to vector<8x32xf32>
    %232 = vector.extract_strided_slice %230 {offsets = [0, 32], sizes = [8, 32], strides = [1, 1]} : vector<8x128xf32> to vector<8x32xf32>
    %233 = vector.extract_strided_slice %230 {offsets = [0, 64], sizes = [8, 32], strides = [1, 1]} : vector<8x128xf32> to vector<8x32xf32>
    %234 = vector.extract_strided_slice %230 {offsets = [0, 96], sizes = [8, 32], strides = [1, 1]} : vector<8x128xf32> to vector<8x32xf32>
    %cst_82 = arith.constant 1.000000e+00 : f32
    %235 = vector.broadcast %cst_82 : f32 to vector<8x32xf32>
    %236 = arith.addf %232, %235 : vector<8x32xf32>
    %237 = arith.mulf %236, %213 : vector<8x32xf32>
    %cst_83 = arith.constant 1.000000e+00 : f32
    %238 = vector.broadcast %cst_83 : f32 to vector<8x32xf32>
    %239 = arith.addf %231, %238 : vector<8x32xf32>
    %240 = arith.mulf %239, %233 : vector<8x32xf32>
    %241 = arith.addf %237, %240 : vector<8x32xf32>
    %cst_84 = arith.constant 5.000000e-01 : f32
    %242 = vector.broadcast %cst_84 : f32 to vector<8x32xf32>
    %243 = arith.mulf %242, %241 : vector<8x32xf32>
    %cst_85 = arith.constant 1.000000e+00 : f32
    %244 = vector.broadcast %cst_85 : f32 to vector<8x32xf32>
    %245 = arith.addf %234, %244 : vector<8x32xf32>
    %cst_86 = arith.constant 5.000000e-01 : f32
    %246 = vector.broadcast %cst_86 : f32 to vector<8x32xf32>
    %247 = arith.mulf %246, %245 : vector<8x32xf32>
    %248 = math.tanh %243 : vector<8x32xf32>
    %249 = arith.mulf %247, %248 : vector<8x32xf32>
    %250 = arith.index_cast %c7_i32 : i32 to index
    %c0_87 = arith.constant 0 : index
    %c0_88 = arith.constant 0 : index
    %251 = vector.load %arg4[%250, %c0_87, %c0_88] : memref<8x8x32xf32, #tpu.memory_space<vmem>>, vector<1x8x32xf32>
    %252 = vector.shape_cast %251 : vector<1x8x32xf32> to vector<8x32xf32>
    %253 = vector.shape_cast %249 : vector<8x32xf32> to vector<1x8x32xf32>
    tpu.vector_store %arg4[%250, %c0_87, %c0_88], %253 {strides = array<i32>} : memref<8x8x32xf32, #tpu.memory_space<vmem>>, vector<1x8x32xf32>,
    %c8_i32_89 = arith.constant 8 : i32
    %c0_90 = arith.constant 0 : index
    %c0_91 = arith.constant 0 : index
    %254 = vector.load %arg5[%c0_90, %c0_91] : memref<8x32xf32, #tpu.memory_space<vmem>>, vector<8x32xf32>
    tpu.vector_store %arg5[%c0_90, %c0_91], %243 {strides = array<i32>} : memref<8x32xf32, #tpu.memory_space<vmem>>, vector<8x32xf32>,
    return
  }
  func.func @transform_0(%arg0: i32) -> (i32, i32, i32) {
    %c0_i32 = arith.constant 0 : i32
    %c0_i32_0 = arith.constant 0 : i32
    %c0_i32_1 = arith.constant 0 : i32
    return %arg0, %c0_i32, %c0_i32_0 : i32, i32, i32
  }
  func.func @transform_1(%arg0: i32) -> (i32, i32) {
    %c0_i32 = arith.constant 0 : i32
    %c0_i32_0 = arith.constant 0 : i32
    %c0_i32_1 = arith.constant 0 : i32
    return %c0_i32, %c0_i32_0 : i32, i32
  }
  func.func @transform_2(%arg0: i32) -> (i32, i32) {
    %c0_i32 = arith.constant 0 : i32
    %c0_i32_0 = arith.constant 0 : i32
    %c0_i32_1 = arith.constant 0 : i32
    return %c0_i32, %c0_i32_0 : i32, i32
  }
  func.func @transform_3(%arg0: i32) -> (i32, i32, i32) {
    %c0_i32 = arith.constant 0 : i32
    %c0_i32_0 = arith.constant 0 : i32
    %c0_i32_1 = arith.constant 0 : i32
    return %c0_i32, %arg0, %c0_i32_0 : i32, i32, i32
  }
  func.func @transform_4(%arg0: i32) -> (i32, i32) {
    %c0_i32 = arith.constant 0 : i32
    %c0_i32_0 = arith.constant 0 : i32
    return %arg0, %c0_i32 : i32, i32
  }
}

</mosaic_0001>

<llo_original>
// kernel: tpu_custom_call.1
$region0: #{tpu_custom_call.1}
  #allocation0 [shape = 'u32[]', space=smem, size = 0x4, offset = 0x4, fixed_abs, tag = 'smem constant byte address 0x4 - core index']
  #allocation1 [shape = 'u32[144,128]{1,0:T(1,128)}', space=vmem, size = 0x12000, scoped, tag = 'internal scratch']
  #allocation2 [shape = 'f32[64,128]{1,0:T(8,128)}', space=vmem, size = 0x8000, scoped, tag = 'scratch operand']
  %s0 = inlined_call_operand.vmem [shape: s32[1,64,1], index: 0, kind: input, shape index: {}]
  %s1 = inlined_call_operand.vmem [shape: f32[32,128], index: 1, kind: input, shape index: {}]
  %s2 = inlined_call_operand.vmem [shape: f32[32,128], index: 2, kind: input, shape index: {}]
  %s3 = inlined_call_operand.hbm [shape: f32[8,8,32], index: 3, kind: output, shape index: {0}]
  %s4 = inlined_call_operand.hbm [shape: f32[8,32], index: 4, kind: output, shape index: {1}]
  %5 = xla_tuple %s3, %s4
  %s6 = sld [smem:[#allocation0]]
  $region30: #{tpu_custom_call.1} parent=0
    _
  %s8 = ssub.s32 1, %s6
  %s9 = scalar_select 0, %s8, %s6
  $region1: #{tpu_custom_call.1} parent=0
    #allocation3 [shape = 'u8[32768]{0}', space=vmem, size = 0x8000, scoped, tag = 'output window, operand 0, single buffered']
    #allocation4 [shape = 's32[1]{0}', space=sflag, size = 0x4, scoped, tag = 'scoped memory for tpu_custom_call.1']
    #allocation5 [shape = 'u8[4096]{0}', space=vmem, size = 0x1000, scoped, tag = 'output window, operand 1, single buffered']
    #allocation6 [shape = 's32[1]{0}', space=sflag, size = 0x4, scoped, tag = 'scoped memory for tpu_custom_call.1']
    %10 = vsyncpa [#allocation4], 0
    %11 = vsyncpa [#allocation6], 0
    // Predicated region
    $region2: #{tpu_custom_call.1} parent=1 // pred_check
      _
    $region3: #{tpu_custom_call.1} parent=1 // pred_check_branch
      %13 = sbr.rel (0) target = $region5
    $region4: #{tpu_custom_call.1} parent=1 // pred_region
      _
    $region5: #{tpu_custom_call.1} parent=1 // pred_fallthru
      _
    // Predicated region
    $region6: #{tpu_custom_call.1} parent=1 // pred_check
      _
    $region7: #{tpu_custom_call.1} parent=1 // pred_check_branch
      %15 = sbr.rel (0) target = $region9
    $region8: #{tpu_custom_call.1} parent=1 // pred_region
      _
    $region9: #{tpu_custom_call.1} parent=1 // pred_fallthru
      _
    // Predicated region
    $region10: #{tpu_custom_call.1} parent=1 // pred_check
      _
    $region11: #{tpu_custom_call.1} parent=1 // pred_check_branch
      %17 = sbr.rel (0) target = $region13
    $region12: #{tpu_custom_call.1} parent=1 // pred_region
      _
    $region13: #{tpu_custom_call.1} parent=1 // pred_fallthru
      _
    %v19 = vld [vmem:[%s0] sm:$0xff]
    %v20 = vld [vmem:[%s0 + $0x8] sm:$0xff]
    %v21 = vld [vmem:[%s0 + $0x10] sm:$0xff]
    %v22 = vld [vmem:[%s0 + $0x18] sm:$0xff]
    %v23 = vld [vmem:[%s0 + $0x20] sm:$0xff]
    %v24 = vld [vmem:[%s0 + $0x28] sm:$0xff]
    %v25 = vld [vmem:[%s0 + $0x30] sm:$0xff]
    %v26 = vld [vmem:[%s0 + $0x38] sm:$0xff]
    %v27 = vlaneseq
    %v28 = vand.u32 %v27, 127
    %29 = vset.pattern.permute.xlu0 0
    %30 = vperm.xlu0 %29, %v19
    %v31 = vpop.permute.xlu0 %30
    %32 = vset.pattern.permute.xlu0 0
    %33 = vperm.xlu0 %32, %v20
    %v34 = vpop.permute.xlu0 %33
    %35 = vset.pattern.permute.xlu0 0
    %36 = vperm.xlu0 %35, %v21
    %v37 = vpop.permute.xlu0 %36
    %38 = vset.pattern.permute.xlu0 0
    %39 = vperm.xlu0 %38, %v22
    %v40 = vpop.permute.xlu0 %39
    %41 = vset.pattern.permute.xlu0 0
    %42 = vperm.xlu0 %41, %v23
    %v43 = vpop.permute.xlu0 %42
    %44 = vset.pattern.permute.xlu0 0
    %45 = vperm.xlu0 %44, %v24
    %v46 = vpop.permute.xlu0 %45
    %47 = vset.pattern.permute.xlu0 0
    %48 = vperm.xlu0 %47, %v25
    %v49 = vpop.permute.xlu0 %48
    %50 = vset.pattern.permute.xlu0 0
    %51 = vperm.xlu0 %50, %v26
    %v52 = vpop.permute.xlu0 %51
    %vm53 = vcmp.eq.s32.totalorder %v31, %v28
    %vm54 = vcmp.eq.s32.totalorder %v34, %v28
    %vm55 = vcmp.eq.s32.totalorder %v37, %v28
    %vm56 = vcmp.eq.s32.totalorder %v40, %v28
    %vm57 = vcmp.eq.s32.totalorder %v43, %v28
    %vm58 = vcmp.eq.s32.totalorder %v46, %v28
    %vm59 = vcmp.eq.s32.totalorder %v49, %v28
    %vm60 = vcmp.eq.s32.totalorder %v52, %v28
    %v61 = vsel %vm53, 1, 0
    %v62 = vsel %vm54, 1, 0
    %v63 = vsel %vm55, 1, 0
    %v64 = vsel %vm56, 1, 0
    %v65 = vsel %vm57, 1, 0
    %v66 = vsel %vm58, 1, 0
    %v67 = vsel %vm59, 1, 0
    %v68 = vsel %vm60, 1, 0
    %v69 = vcvt.s32.f32 %v61
    %v70 = vcvt.s32.f32 %v62
    %v71 = vcvt.s32.f32 %v63
    %v72 = vcvt.s32.f32 %v64
    %v73 = vcvt.s32.f32 %v65
    %v74 = vcvt.s32.f32 %v66
    %v75 = vcvt.s32.f32 %v67
    %v76 = vcvt.s32.f32 %v68
    %v77 = vld [vmem:[%s1] sm:$0xff]
    %v78 = vld [vmem:[%s1 + $0x8] sm:$0xff]
    %v79 = vld [vmem:[%s1 + $0x10] sm:$0xff]
    %v80 = vld [vmem:[%s1 + $0x18] sm:$0xff]
    %vm81 = vcmask 261120
    %v83 = vsel %vm81, %v69, 0
    %v86 = vsel %vm81, %v70, 0
    %v89 = vsel %vm81, %v71, 0
    %v92 = vsel %vm81, %v72, 0
    %v95 = vsel %vm81, %v73, 0
    %v98 = vsel %vm81, %v74, 0
    %v101 = vsel %vm81, %v75, 0
    %v104 = vsel %vm81, %v76, 0
    %106 = vmatprep.subr.mxu0 0.0
    %107 = vmatpush1.msra.mxu0 0.0
    %108 = vmatprep.subr.mxu0 0.0
    %109 = vmatpush1.msra.mxu0 0.0
    %110 = vmatprep.subr.mxu0 0.0
    %111 = vmatpush1.msra.mxu0 0.0
    %112 = vmatprep.subr.mxu0 0.0
    %113 = vmatpush1.msra.mxu0 0.0
    %114 = vmatprep.subr.mxu0 0.0
    %115 = vmatpush1.msra.mxu0 0.0
    %116 = vmatprep.subr.mxu0 0.0
    %117 = vmatpush1.msra.mxu0 0.0
    %118 = vmatprep.subr.mxu0 0.0
    %119 = vmatpush1.msra.mxu0 0.0
    %120 = vmatprep.subr.mxu0 0.0
    %121 = vmatpush1.msra.mxu0 0.0
    %122 = vmatprep.subr.mxu0 0.0
    %123 = vmatpush1.msra.mxu0 0.0
    %124 = vmatprep.subr.mxu0 0.0
    %125 = vmatpush1.msra.mxu0 0.0
    %126 = vmatprep.subr.mxu0 0.0
    %127 = vmatpush1.msra.mxu0 0.0
    %128 = vmatprep.subr.mxu0 0.0
    %129 = vmatpush1.msra.mxu0 0.0
    %130 = vmatprep.subr.mxu0 0.0
    %131 = vmatpush1.msra.mxu0 %v80
    %132 = vmatprep.subr.mxu0 0.0
    %133 = vmatpush1.msra.mxu0 %v79
    %134 = vmatprep.subr.mxu0 0.0
    %135 = vmatpush1.msra.mxu0 %v78
    %136 = vmatprep.subr.mxu0 0.0
    %137 = vmatpush1.msra.mxu0 %v77
    %138 = vmatprep.subr.mxu0 0.0
    %139 = vmatpush2.msra.mxu0 0.0
    %140 = vmatprep.subr.mxu0 0.0
    %141 = vmatpush2.msra.mxu0 0.0
    %142 = vmatprep.subr.mxu0 0.0
    %143 = vmatpush2.msra.mxu0 0.0
    %144 = vmatprep.subr.mxu0 0.0
    %145 = vmatpush2.msra.mxu0 0.0
    %146 = vmatprep.subr.mxu0 0.0
    %147 = vmatpush2.msra.mxu0 0.0
    %148 = vmatprep.subr.mxu0 0.0
    %149 = vmatpush2.msra.mxu0 0.0
    %150 = vmatprep.subr.mxu0 0.0
    %151 = vmatpush2.msra.mxu0 0.0
    %152 = vmatprep.subr.mxu0 0.0
    %153 = vmatpush2.msra.mxu0 0.0
    %154 = vmatprep.subr.mxu0 0.0
    %155 = vmatpush2.msra.mxu0 0.0
    %156 = vmatprep.subr.mxu0 0.0
    %157 = vmatpush2.msra.mxu0 0.0
    %158 = vmatprep.subr.mxu0 0.0
    %159 = vmatpush2.msra.mxu0 0.0
    %160 = vmatprep.subr.mxu0 0.0
    %161 = vmatpush2.msra.mxu0 0.0
    %162 = vmatprep.subr.mxu0 0.0
    %163 = vmatpush2.msra.mxu0 0.0
    %164 = vmatprep.subr.mxu0 0.0
    %165 = vmatpush2.msra.mxu0 0.0
    %166 = vmatprep.subr.mxu0 0.0
    %167 = vmatpush2.msra.mxu0 0.0
    %168 = vmatprep.subr.mxu0 0.0
    %169 = vmatpush2.msra.mxu0 0.0
    %170 = vmatprep.mubr.f32.mxu0 0.0
    %171 = vmatmul.mubr.f32.gmra.mxu0 %v83
    %v172 = vpop.f32.mrf.mxu0
    %v173 = vadd.f32 0.0, %v172
    %v174 = vpop.f32.mrf.mxu0
    %175 = vmatprep.mubr.f32.mxu0 0.0
    %176 = vmatmul.mubr.f32.gmra.mxu0 %v86
    %v177 = vpop.f32.mrf.mxu0
    %v178 = vadd.f32 0.0, %v177
    %v179 = vpop.f32.mrf.mxu0
    %180 = vmatprep.mubr.f32.mxu0 0.0
    %181 = vmatmul.mubr.f32.gmra.mxu0 %v89
    %v182 = vpop.f32.mrf.mxu0
    %v183 = vadd.f32 0.0, %v182
    %v184 = vpop.f32.mrf.mxu0
    %185 = vmatprep.mubr.f32.mxu0 0.0
    %186 = vmatmul.mubr.f32.gmra.mxu0 %v92
    %v187 = vpop.f32.mrf.mxu0
    %v188 = vadd.f32 0.0, %v187
    %v189 = vpop.f32.mrf.mxu0
    %190 = vmatprep.mubr.f32.mxu0 0.0
    %191 = vmatmul.mubr.f32.gmra.mxu0 %v95
    %v192 = vpop.f32.mrf.mxu0
    %v193 = vadd.f32 0.0, %v192
    %v194 = vpop.f32.mrf.mxu0
    %195 = vmatprep.mubr.f32.mxu0 0.0
    %196 = vmatmul.mubr.f32.gmra.mxu0 %v98
    %v197 = vpop.f32.mrf.mxu0
    %v198 = vadd.f32 0.0, %v197
    %v199 = vpop.f32.mrf.mxu0
    %200 = vmatprep.mubr.f32.mxu0 0.0
    %201 = vmatmul.mubr.f32.gmra.mxu0 %v101
    %v202 = vpop.f32.mrf.mxu0
    %v203 = vadd.f32 0.0, %v202
    %v204 = vpop.f32.mrf.mxu0
    %205 = vmatprep.mubr.f32.mxu0 0.0
    %206 = vmatmul.mubr.f32.gmra.mxu0 %v104
    %v207 = vpop.f32.mrf.mxu0
    %v208 = vadd.f32 0.0, %v207
    %v209 = vpop.f32.mrf.mxu0
    %210 = vdwg.mxu0
    %211 = vst [vmem:[#allocation2] sm:$0xff] %v173
    %212 = vst [vmem:[#allocation2 + $0x8] sm:$0xff] %v178
    %213 = vst [vmem:[#allocation2 + $0x10] sm:$0xff] %v183
    %214 = vst [vmem:[#allocation2 + $0x18] sm:$0xff] %v188
    %215 = vst [vmem:[#allocation2 + $0x20] sm:$0xff] %v193
    %216 = vst [vmem:[#allocation2 + $0x28] sm:$0xff] %v198
    %217 = vst [vmem:[#allocation2 + $0x30] sm:$0xff] %v203
    %218 = vst [vmem:[#allocation2 + $0x38] sm:$0xff] %v208
    %v219 = vld [vmem:[%s2] sm:$0xff]
    %v220 = vld [vmem:[%s2 + $0x8] sm:$0xff]
    %v221 = vld [vmem:[%s2 + $0x10] sm:$0xff]
    %v222 = vld [vmem:[%s2 + $0x18] sm:$0xff]
    %v223 = vpack.c.bf16 %v220, %v219
    %v224 = vpack.c.bf16 %v222, %v221
    %v225 = vld [vmem:[#allocation2] sm:$0xff]
    %v227 = vsel %vm81, 0, 0
    %229 = vmatprep.subr.bf16.mxu0 0
    %230 = vmatpush1.bf16.msra.mxu0 0
    %231 = vmatprep.subr.bf16.mxu0 0
    %232 = vmatpush1.bf16.msra.mxu0 0
    %233 = vmatprep.subr.bf16.mxu0 0
    %234 = vmatpush1.bf16.msra.mxu0 0
    %235 = vmatprep.subr.bf16.mxu0 0
    %236 = vmatpush1.bf16.msra.mxu0 0
    %237 = vmatprep.subr.bf16.mxu0 0
    %238 = vmatpush1.bf16.msra.mxu0 0
    %239 = vmatprep.subr.bf16.mxu0 0
    %240 = vmatpush1.bf16.msra.mxu0 0
    %241 = vmatprep.subr.bf16.mxu0 0
    %242 = vmatpush1.bf16.msra.mxu0 %v224
    %243 = vmatprep.subr.bf16.mxu0 0
    %244 = vmatpush1.bf16.msra.mxu0 %v223
    %245 = vmatprep.subr.bf16.mxu0 0
    %246 = vmatpush2.bf16.msra.mxu0 0
    %247 = vmatprep.subr.bf16.mxu0 0
    %248 = vmatpush2.bf16.msra.mxu0 0
    %249 = vmatprep.subr.bf16.mxu0 0
    %250 = vmatpush2.bf16.msra.mxu0 0
    %251 = vmatprep.subr.bf16.mxu0 0
    %252 = vmatpush2.bf16.msra.mxu0 0
    %253 = vmatprep.subr.bf16.mxu0 0
    %254 = vmatpush2.bf16.msra.mxu0 0
    %255 = vmatprep.subr.bf16.mxu0 0
    %256 = vmatpush2.bf16.msra.mxu0 0
    %257 = vmatprep.subr.bf16.mxu0 0
    %258 = vmatpush2.bf16.msra.mxu0 0
    %259 = vmatprep.subr.bf16.mxu0 0
    %260 = vmatpush2.bf16.msra.mxu0 0
    %261 = vmatprep.mubr.bf16.mxu0 0
    %262 = vmatmul.mubr.bf16.gmra.mxu0 %v227
    %v263 = vpop.f32.mrf.mxu0
    %v264 = vadd.f32 0.0, %v263
    %v265 = vpop.f32.mrf.mxu0
    %v266 = vpop.f32.mrf.mxu0
    %v267 = vpop.f32.mrf.mxu0
    %268 = vdwg.mxu0
    %v269 = vadd.f32 %v225, %v264
    %v270 = vtanh.pop %v269
    %v271 = vadd.f32 %v270, 1.0
    %v272 = vmul.f32 %v271, 0.0
    %274 = vrot.lane.b32.xlu0 %v270, 64
    %v275 = vpop.permute.xlu0 %274
    %v277 = vmul.f32 %v271, %v275
    %279 = vrot.lane.b32.xlu0 %v277, 32
    %v280 = vpop.permute.xlu0 %279
    %v282 = vadd.f32 %v272, %v280
    %v283 = vmul.f32 %v282, 0.5
    %v284 = vmul.f32 %v271, 0.5
    %v285 = vtanh.pop %v283
    %287 = vrot.lane.b32.xlu0 %v285, 64
    %v288 = vpop.permute.xlu0 %287
    %v290 = vmul.f32 %v284, %v288
    %292 = vrot.lane.b32.xlu0 %v290, 32
    %v293 = vpop.permute.xlu0 %292
    %295 = vst.msk [vmem:[#allocation3] sm:$0xff] %vm81, %v293
    %v296 = vld [vmem:[#allocation2 + $0x8] sm:$0xff]
    %v297 = vpack.c.bf16 %v290, %v290
    %299 = vrot.lane.b32.xlu0 %v297, 32
    %v300 = vpop.permute.xlu0 %299
    %v302 = vsel %vm81, %v300, 0
    %304 = vmatprep.subr.bf16.mxu0 0
    %305 = vmatpush1.bf16.msra.mxu0 0
    %306 = vmatprep.subr.bf16.mxu0 0
    %307 = vmatpush1.bf16.msra.mxu0 0
    %308 = vmatprep.subr.bf16.mxu0 0
    %309 = vmatpush1.bf16.msra.mxu0 0
    %310 = vmatprep.subr.bf16.mxu0 0
    %311 = vmatpush1.bf16.msra.mxu0 0
    %312 = vmatprep.subr.bf16.mxu0 0
    %313 = vmatpush1.bf16.msra.mxu0 0
    %314 = vmatprep.subr.bf16.mxu0 0
    %315 = vmatpush1.bf16.msra.mxu0 0
    %316 = vmatprep.subr.bf16.mxu0 0
    %317 = vmatpush1.bf16.msra.mxu0 %v224
    %318 = vmatprep.subr.bf16.mxu0 0
    %319 = vmatpush1.bf16.msra.mxu0 %v223
    %320 = vmatprep.subr.bf16.mxu0 0
    %321 = vmatpush2.bf16.msra.mxu0 0
    %322 = vmatprep.subr.bf16.mxu0 0
    %323 = vmatpush2.bf16.msra.mxu0 0
    %324 = vmatprep.subr.bf16.mxu0 0
    %325 = vmatpush2.bf16.msra.mxu0 0
    %326 = vmatprep.subr.bf16.mxu0 0
    %327 = vmatpush2.bf16.msra.mxu0 0
    %328 = vmatprep.subr.bf16.mxu0 0
    %329 = vmatpush2.bf16.msra.mxu0 0
    %330 = vmatprep.subr.bf16.mxu0 0
    %331 = vmatpush2.bf16.msra.mxu0 0
    %332 = vmatprep.subr.bf16.mxu0 0
    %333 = vmatpush2.bf16.msra.mxu0 0
    %334 = vmatprep.subr.bf16.mxu0 0
    %335 = vmatpush2.bf16.msra.mxu0 0
    %336 = vmatprep.mubr.bf16.mxu0 0
    %337 = vmatmul.mubr.bf16.gmra.mxu0 %v302
    %v338 = vpop.f32.mrf.mxu0
    %v339 = vadd.f32 0.0, %v338
    %v340 = vpop.f32.mrf.mxu0
    %v341 = vpop.f32.mrf.mxu0
    %v342 = vpop.f32.mrf.mxu0
    %343 = vdwg.mxu0
    %v344 = vadd.f32 %v296, %v339
    %v345 = vtanh.pop %v344
    %v346 = vadd.f32 %v345, 1.0
    %v347 = vmul.f32 %v346, %v283
    %349 = vrot.lane.b32.xlu0 %v345, 64
    %v350 = vpop.permute.xlu0 %349
    %v352 = vmul.f32 %v346, %v350
    %354 = vrot.lane.b32.xlu0 %v352, 32
    %v355 = vpop.permute.xlu0 %354
    %v357 = vadd.f32 %v347, %v355
    %v358 = vmul.f32 %v357, 0.5
    %v359 = vmul.f32 %v346, 0.5
    %v360 = vtanh.pop %v358
    %362 = vrot.lane.b32.xlu0 %v360, 64
    %v363 = vpop.permute.xlu0 %362
    %v365 = vmul.f32 %v359, %v363
    %367 = vrot.lane.b32.xlu0 %v365, 32
    %v368 = vpop.permute.xlu0 %367
    %s370 = scalar_lea.vmem [#allocation3], 8
    %371 = vst.msk [vmem:[%s370] sm:$0xff] %vm81, %v368
    %v372 = vld [vmem:[#allocation2 + $0x10] sm:$0xff]
    %v373 = vpack.c.bf16 %v365, %v365
    %375 = vrot.lane.b32.xlu0 %v373, 32
    %v376 = vpop.permute.xlu0 %375
    %v378 = vsel %vm81, %v376, 0
    %380 = vmatprep.subr.bf16.mxu0 0
    %381 = vmatpush1.bf16.msra.mxu0 0
    %382 = vmatprep.subr.bf16.mxu0 0
    %383 = vmatpush1.bf16.msra.mxu0 0
    %384 = vmatprep.subr.bf16.mxu0 0
    %385 = vmatpush1.bf16.msra.mxu0 0
    %386 = vmatprep.subr.bf16.mxu0 0
    %387 = vmatpush1.bf16.msra.mxu0 0
    %388 = vmatprep.subr.bf16.mxu0 0
    %389 = vmatpush1.bf16.msra.mxu0 0
    %390 = vmatprep.subr.bf16.mxu0 0
    %391 = vmatpush1.bf16.msra.mxu0 0
    %392 = vmatprep.subr.bf16.mxu0 0
    %393 = vmatpush1.bf16.msra.mxu0 %v224
    %394 = vmatprep.subr.bf16.mxu0 0
    %395 = vmatpush1.bf16.msra.mxu0 %v223
    %396 = vmatprep.subr.bf16.mxu0 0
    %397 = vmatpush2.bf16.msra.mxu0 0
    %398 = vmatprep.subr.bf16.mxu0 0
    %399 = vmatpush2.bf16.msra.mxu0 0
    %400 = vmatprep.subr.bf16.mxu0 0
    %401 = vmatpush2.bf16.msra.mxu0 0
    %402 = vmatprep.subr.bf16.mxu0 0
    %403 = vmatpush2.bf16.msra.mxu0 0
    %404 = vmatprep.subr.bf16.mxu0 0
    %405 = vmatpush2.bf16.msra.mxu0 0
    %406 = vmatprep.subr.bf16.mxu0 0
    %407 = vmatpush2.bf16.msra.mxu0 0
    %408 = vmatprep.subr.bf16.mxu0 0
    %409 = vmatpush2.bf16.msra.mxu0 0
    %410 = vmatprep.subr.bf16.mxu0 0
    %411 = vmatpush2.bf16.msra.mxu0 0
    %412 = vmatprep.mubr.bf16.mxu0 0
    %413 = vmatmul.mubr.bf16.gmra.mxu0 %v378
    %v414 = vpop.f32.mrf.mxu0
    %v415 = vadd.f32 0.0, %v414
    %v416 = vpop.f32.mrf.mxu0
    %v417 = vpop.f32.mrf.mxu0
    %v418 = vpop.f32.mrf.mxu0
    %419 = vdwg.mxu0
    %v420 = vadd.f32 %v372, %v415
    %v421 = vtanh.pop %v420
    %v422 = vadd.f32 %v421, 1.0
    %v423 = vmul.f32 %v422, %v358
    %425 = vrot.lane.b32.xlu0 %v421, 64
    %v426 = vpop.permute.xlu0 %425
    %v428 = vmul.f32 %v422, %v426
    %430 = vrot.lane.b32.xlu0 %v428, 32
    %v431 = vpop.permute.xlu0 %430
    %v433 = vadd.f32 %v423, %v431
    %v434 = vmul.f32 %v433, 0.5
    %v435 = vmul.f32 %v422, 0.5
    %v436 = vtanh.pop %v434
    %438 = vrot.lane.b32.xlu0 %v436, 64
    %v439 = vpop.permute.xlu0 %438
    %v441 = vmul.f32 %v435, %v439
    %443 = vrot.lane.b32.xlu0 %v441, 32
    %v444 = vpop.permute.xlu0 %443
    %s446 = scalar_lea.vmem [#allocation3], 16
    %447 = vst.msk [vmem:[%s446] sm:$0xff] %vm81, %v444
    %v448 = vld [vmem:[#allocation2 + $0x18] sm:$0xff]
    %v449 = vpack.c.bf16 %v441, %v441
    %451 = vrot.lane.b32.xlu0 %v449, 32
    %v452 = vpop.permute.xlu0 %451
    %v454 = vsel %vm81, %v452, 0
    %456 = vmatprep.subr.bf16.mxu0 0
    %457 = vmatpush1.bf16.msra.mxu0 0
    %458 = vmatprep.subr.bf16.mxu0 0
    %459 = vmatpush1.bf16.msra.mxu0 0
    %460 = vmatprep.subr.bf16.mxu0 0
    %461 = vmatpush1.bf16.msra.mxu0 0
    %462 = vmatprep.subr.bf16.mxu0 0
    %463 = vmatpush1.bf16.msra.mxu0 0
    %464 = vmatprep.subr.bf16.mxu0 0
    %465 = vmatpush1.bf16.msra.mxu0 0
    %466 = vmatprep.subr.bf16.mxu0 0
    %467 = vmatpush1.bf16.msra.mxu0 0
    %468 = vmatprep.subr.bf16.mxu0 0
    %469 = vmatpush1.bf16.msra.mxu0 %v224
    %470 = vmatprep.subr.bf16.mxu0 0
    %471 = vmatpush1.bf16.msra.mxu0 %v223
    %472 = vmatprep.subr.bf16.mxu0 0
    %473 = vmatpush2.bf16.msra.mxu0 0
    %474 = vmatprep.subr.bf16.mxu0 0
    %475 = vmatpush2.bf16.msra.mxu0 0
    %476 = vmatprep.subr.bf16.mxu0 0
    %477 = vmatpush2.bf16.msra.mxu0 0
    %478 = vmatprep.subr.bf16.mxu0 0
    %479 = vmatpush2.bf16.msra.mxu0 0
    %480 = vmatprep.subr.bf16.mxu0 0
    %481 = vmatpush2.bf16.msra.mxu0 0
    %482 = vmatprep.subr.bf16.mxu0 0
    %483 = vmatpush2.bf16.msra.mxu0 0
    %484 = vmatprep.subr.bf16.mxu0 0
    %485 = vmatpush2.bf16.msra.mxu0 0
    %486 = vmatprep.subr.bf16.mxu0 0
    %487 = vmatpush2.bf16.msra.mxu0 0
    %488 = vmatprep.mubr.bf16.mxu0 0
    %489 = vmatmul.mubr.bf16.gmra.mxu0 %v454
    %v490 = vpop.f32.mrf.mxu0
    %v491 = vadd.f32 0.0, %v490
    %v492 = vpop.f32.mrf.mxu0
    %v493 = vpop.f32.mrf.mxu0
    %v494 = vpop.f32.mrf.mxu0
    %495 = vdwg.mxu0
    %v496 = vadd.f32 %v448, %v491
    %v497 = vtanh.pop %v496
    %v498 = vadd.f32 %v497, 1.0
    %v499 = vmul.f32 %v498, %v434
    %501 = vrot.lane.b32.xlu0 %v497, 64
    %v502 = vpop.permute.xlu0 %501
    %v504 = vmul.f32 %v498, %v502
    %506 = vrot.lane.b32.xlu0 %v504, 32
    %v507 = vpop.permute.xlu0 %506
    %v509 = vadd.f32 %v499, %v507
    %v510 = vmul.f32 %v509, 0.5
    %v511 = vmul.f32 %v498, 0.5
    %v512 = vtanh.pop %v510
    %514 = vrot.lane.b32.xlu0 %v512, 64
    %v515 = vpop.permute.xlu0 %514
    %v517 = vmul.f32 %v511, %v515
    %519 = vrot.lane.b32.xlu0 %v517, 32
    %v520 = vpop.permute.xlu0 %519
    %s522 = scalar_lea.vmem [#allocation3], 24
    %523 = vst.msk [vmem:[%s522] sm:$0xff] %vm81, %v520
    %v524 = vld [vmem:[#allocation2 + $0x20] sm:$0xff]
    %v525 = vpack.c.bf16 %v517, %v517
    %527 = vrot.lane.b32.xlu0 %v525, 32
    %v528 = vpop.permute.xlu0 %527
    %v530 = vsel %vm81, %v528, 0
    %532 = vmatprep.subr.bf16.mxu0 0
    %533 = vmatpush1.bf16.msra.mxu0 0
    %534 = vmatprep.subr.bf16.mxu0 0
    %535 = vmatpush1.bf16.msra.mxu0 0
    %536 = vmatprep.subr.bf16.mxu0 0
    %537 = vmatpush1.bf16.msra.mxu0 0
    %538 = vmatprep.subr.bf16.mxu0 0
    %539 = vmatpush1.bf16.msra.mxu0 0
    %540 = vmatprep.subr.bf16.mxu0 0
    %541 = vmatpush1.bf16.msra.mxu0 0
    %542 = vmatprep.subr.bf16.mxu0 0
    %543 = vmatpush1.bf16.msra.mxu0 0
    %544 = vmatprep.subr.bf16.mxu0 0
    %545 = vmatpush1.bf16.msra.mxu0 %v224
    %546 = vmatprep.subr.bf16.mxu0 0
    %547 = vmatpush1.bf16.msra.mxu0 %v223
    %548 = vmatprep.subr.bf16.mxu0 0
    %549 = vmatpush2.bf16.msra.mxu0 0
    %550 = vmatprep.subr.bf16.mxu0 0
    %551 = vmatpush2.bf16.msra.mxu0 0
    %552 = vmatprep.subr.bf16.mxu0 0
    %553 = vmatpush2.bf16.msra.mxu0 0
    %554 = vmatprep.subr.bf16.mxu0 0
    %555 = vmatpush2.bf16.msra.mxu0 0
    %556 = vmatprep.subr.bf16.mxu0 0
    %557 = vmatpush2.bf16.msra.mxu0 0
    %558 = vmatprep.subr.bf16.mxu0 0
    %559 = vmatpush2.bf16.msra.mxu0 0
    %560 = vmatprep.subr.bf16.mxu0 0
    %561 = vmatpush2.bf16.msra.mxu0 0
    %562 = vmatprep.subr.bf16.mxu0 0
    %563 = vmatpush2.bf16.msra.mxu0 0
    %564 = vmatprep.mubr.bf16.mxu0 0
    %565 = vmatmul.mubr.bf16.gmra.mxu0 %v530
    %v566 = vpop.f32.mrf.mxu0
    %v567 = vadd.f32 0.0, %v566
    %v568 = vpop.f32.mrf.mxu0
    %v569 = vpop.f32.mrf.mxu0
    %v570 = vpop.f32.mrf.mxu0
    %571 = vdwg.mxu0
    %v572 = vadd.f32 %v524, %v567
    %v573 = vtanh.pop %v572
    %v574 = vadd.f32 %v573, 1.0
    %v575 = vmul.f32 %v574, %v510
    %577 = vrot.lane.b32.xlu0 %v573, 64
    %v578 = vpop.permute.xlu0 %577
    %v580 = vmul.f32 %v574, %v578
    %582 = vrot.lane.b32.xlu0 %v580, 32
    %v583 = vpop.permute.xlu0 %582
    %v585 = vadd.f32 %v575, %v583
    %v586 = vmul.f32 %v585, 0.5
    %v587 = vmul.f32 %v574, 0.5
    %v588 = vtanh.pop %v586
    %590 = vrot.lane.b32.xlu0 %v588, 64
    %v591 = vpop.permute.xlu0 %590
    %v593 = vmul.f32 %v587, %v591
    %595 = vrot.lane.b32.xlu0 %v593, 32
    %v596 = vpop.permute.xlu0 %595
    %s598 = scalar_lea.vmem [#allocation3], 32
    %599 = vst.msk [vmem:[%s598] sm:$0xff] %vm81, %v596
    %v600 = vld [vmem:[#allocation2 + $0x28] sm:$0xff]
    %v601 = vpack.c.bf16 %v593, %v593
    %603 = vrot.lane.b32.xlu0 %v601, 32
    %v604 = vpop.permute.xlu0 %603
    %v606 = vsel %vm81, %v604, 0
    %608 = vmatprep.subr.bf16.mxu0 0
    %609 = vmatpush1.bf16.msra.mxu0 0
    %610 = vmatprep.subr.bf16.mxu0 0
    %611 = vmatpush1.bf16.msra.mxu0 0
    %612 = vmatprep.subr.bf16.mxu0 0
    %613 = vmatpush1.bf16.msra.mxu0 0
    %614 = vmatprep.subr.bf16.mxu0 0
    %615 = vmatpush1.bf16.msra.mxu0 0
    %616 = vmatprep.subr.bf16.mxu0 0
    %617 = vmatpush1.bf16.msra.mxu0 0
    %618 = vmatprep.subr.bf16.mxu0 0
    %619 = vmatpush1.bf16.msra.mxu0 0
    %620 = vmatprep.subr.bf16.mxu0 0
    %621 = vmatpush1.bf16.msra.mxu0 %v224
    %622 = vmatprep.subr.bf16.mxu0 0
    %623 = vmatpush1.bf16.msra.mxu0 %v223
    %624 = vmatprep.subr.bf16.mxu0 0
    %625 = vmatpush2.bf16.msra.mxu0 0
    %626 = vmatprep.subr.bf16.mxu0 0
    %627 = vmatpush2.bf16.msra.mxu0 0
    %628 = vmatprep.subr.bf16.mxu0 0
    %629 = vmatpush2.bf16.msra.mxu0 0
    %630 = vmatprep.subr.bf16.mxu0 0
    %631 = vmatpush2.bf16.msra.mxu0 0
    %632 = vmatprep.subr.bf16.mxu0 0
    %633 = vmatpush2.bf16.msra.mxu0 0
    %634 = vmatprep.subr.bf16.mxu0 0
    %635 = vmatpush2.bf16.msra.mxu0 0
    %636 = vmatprep.subr.bf16.mxu0 0
    %637 = vmatpush2.bf16.msra.mxu0 0
    %638 = vmatprep.subr.bf16.mxu0 0
    %639 = vmatpush2.bf16.msra.mxu0 0
    %640 = vmatprep.mubr.bf16.mxu0 0
    %641 = vmatmul.mubr.bf16.gmra.mxu0 %v606
    %v642 = vpop.f32.mrf.mxu0
    %v643 = vadd.f32 0.0, %v642
    %v644 = vpop.f32.mrf.mxu0
    %v645 = vpop.f32.mrf.mxu0
    %v646 = vpop.f32.mrf.mxu0
    %647 = vdwg.mxu0
    %v648 = vadd.f32 %v600, %v643
    %v649 = vtanh.pop %v648
    %v650 = vadd.f32 %v649, 1.0
    %v651 = vmul.f32 %v650, %v586
    %653 = vrot.lane.b32.xlu0 %v649, 64
    %v654 = vpop.permute.xlu0 %653
    %v656 = vmul.f32 %v650, %v654
    %658 = vrot.lane.b32.xlu0 %v656, 32
    %v659 = vpop.permute.xlu0 %658
    %v661 = vadd.f32 %v651, %v659
    %v662 = vmul.f32 %v661, 0.5
    %v663 = vmul.f32 %v650, 0.5
    %v664 = vtanh.pop %v662
    %666 = vrot.lane.b32.xlu0 %v664, 64
    %v667 = vpop.permute.xlu0 %666
    %v669 = vmul.f32 %v663, %v667
    %671 = vrot.lane.b32.xlu0 %v669, 32
    %v672 = vpop.permute.xlu0 %671
    %s674 = scalar_lea.vmem [#allocation3], 40
    %675 = vst.msk [vmem:[%s674] sm:$0xff] %vm81, %v672
    %v676 = vld [vmem:[#allocation2 + $0x30] sm:$0xff]
    %v677 = vpack.c.bf16 %v669, %v669
    %679 = vrot.lane.b32.xlu0 %v677, 32
    %v680 = vpop.permute.xlu0 %679
    %v682 = vsel %vm81, %v680, 0
    %684 = vmatprep.subr.bf16.mxu0 0
    %685 = vmatpush1.bf16.msra.mxu0 0
    %686 = vmatprep.subr.bf16.mxu0 0
    %687 = vmatpush1.bf16.msra.mxu0 0
    %688 = vmatprep.subr.bf16.mxu0 0
    %689 = vmatpush1.bf16.msra.mxu0 0
    %690 = vmatprep.subr.bf16.mxu0 0
    %691 = vmatpush1.bf16.msra.mxu0 0
    %692 = vmatprep.subr.bf16.mxu0 0
    %693 = vmatpush1.bf16.msra.mxu0 0
    %694 = vmatprep.subr.bf16.mxu0 0
    %695 = vmatpush1.bf16.msra.mxu0 0
    %696 = vmatprep.subr.bf16.mxu0 0
    %697 = vmatpush1.bf16.msra.mxu0 %v224
    %698 = vmatprep.subr.bf16.mxu0 0
    %699 = vmatpush1.bf16.msra.mxu0 %v223
    %700 = vmatprep.subr.bf16.mxu0 0
    %701 = vmatpush2.bf16.msra.mxu0 0
    %702 = vmatprep.subr.bf16.mxu0 0
    %703 = vmatpush2.bf16.msra.mxu0 0
    %704 = vmatprep.subr.bf16.mxu0 0
    %705 = vmatpush2.bf16.msra.mxu0 0
    %706 = vmatprep.subr.bf16.mxu0 0
    %707 = vmatpush2.bf16.msra.mxu0 0
    %708 = vmatprep.subr.bf16.mxu0 0
    %709 = vmatpush2.bf16.msra.mxu0 0
    %710 = vmatprep.subr.bf16.mxu0 0
    %711 = vmatpush2.bf16.msra.mxu0 0
    %712 = vmatprep.subr.bf16.mxu0 0
    %713 = vmatpush2.bf16.msra.mxu0 0
    %714 = vmatprep.subr.bf16.mxu0 0
    %715 = vmatpush2.bf16.msra.mxu0 0
    %716 = vmatprep.mubr.bf16.mxu0 0
    %717 = vmatmul.mubr.bf16.gmra.mxu0 %v682
    %v718 = vpop.f32.mrf.mxu0
    %v719 = vadd.f32 0.0, %v718
    %v720 = vpop.f32.mrf.mxu0
    %v721 = vpop.f32.mrf.mxu0
    %v722 = vpop.f32.mrf.mxu0
    %723 = vdwg.mxu0
    %v724 = vadd.f32 %v676, %v719
    %v725 = vtanh.pop %v724
    %v726 = vadd.f32 %v725, 1.0
    %v727 = vmul.f32 %v726, %v662
    %729 = vrot.lane.b32.xlu0 %v725, 64
    %v730 = vpop.permute.xlu0 %729
    %v732 = vmul.f32 %v726, %v730
    %734 = vrot.lane.b32.xlu0 %v732, 32
    %v735 = vpop.permute.xlu0 %734
    %v737 = vadd.f32 %v727, %v735
    %v738 = vmul.f32 %v737, 0.5
    %v739 = vmul.f32 %v726, 0.5
    %v740 = vtanh.pop %v738
    %742 = vrot.lane.b32.xlu0 %v740, 64
    %v743 = vpop.permute.xlu0 %742
    %v745 = vmul.f32 %v739, %v743
    %747 = vrot.lane.b32.xlu0 %v745, 32
    %v748 = vpop.permute.xlu0 %747
    %s750 = scalar_lea.vmem [#allocation3], 48
    %751 = vst.msk [vmem:[%s750] sm:$0xff] %vm81, %v748
    %v752 = vld [vmem:[#allocation2 + $0x38] sm:$0xff]
    %v753 = vpack.c.bf16 %v745, %v745
    %755 = vrot.lane.b32.xlu0 %v753, 32
    %v756 = vpop.permute.xlu0 %755
    %v758 = vsel %vm81, %v756, 0
    %760 = vmatprep.subr.bf16.mxu0 0
    %761 = vmatpush1.bf16.msra.mxu0 0
    %762 = vmatprep.subr.bf16.mxu0 0
    %763 = vmatpush1.bf16.msra.mxu0 0
    %764 = vmatprep.subr.bf16.mxu0 0
    %765 = vmatpush1.bf16.msra.mxu0 0
    %766 = vmatprep.subr.bf16.mxu0 0
    %767 = vmatpush1.bf16.msra.mxu0 0
    %768 = vmatprep.subr.bf16.mxu0 0
    %769 = vmatpush1.bf16.msra.mxu0 0
    %770 = vmatprep.subr.bf16.mxu0 0
    %771 = vmatpush1.bf16.msra.mxu0 0
    %772 = vmatprep.subr.bf16.mxu0 0
    %773 = vmatpush1.bf16.msra.mxu0 %v224
    %774 = vmatprep.subr.bf16.mxu0 0
    %775 = vmatpush1.bf16.msra.mxu0 %v223
    %776 = vmatprep.subr.bf16.mxu0 0
    %777 = vmatpush2.bf16.msra.mxu0 0
    %778 = vmatprep.subr.bf16.mxu0 0
    %779 = vmatpush2.bf16.msra.mxu0 0
    %780 = vmatprep.subr.bf16.mxu0 0
    %781 = vmatpush2.bf16.msra.mxu0 0
    %782 = vmatprep.subr.bf16.mxu0 0
    %783 = vmatpush2.bf16.msra.mxu0 0
    %784 = vmatprep.subr.bf16.mxu0 0
    %785 = vmatpush2.bf16.msra.mxu0 0
    %786 = vmatprep.subr.bf16.mxu0 0
    %787 = vmatpush2.bf16.msra.mxu0 0
    %788 = vmatprep.subr.bf16.mxu0 0
    %789 = vmatpush2.bf16.msra.mxu0 0
    %790 = vmatprep.subr.bf16.mxu0 0
    %791 = vmatpush2.bf16.msra.mxu0 0
    %792 = vmatprep.mubr.bf16.mxu0 0
    %793 = vmatmul.mubr.bf16.gmra.mxu0 %v758
    %v794 = vpop.f32.mrf.mxu0
    %v795 = vadd.f32 0.0, %v794
    %v796 = vpop.f32.mrf.mxu0
    %v797 = vpop.f32.mrf.mxu0
    %v798 = vpop.f32.mrf.mxu0
    %799 = vdwg.mxu0
    %v800 = vadd.f32 %v752, %v795
    %v801 = vtanh.pop %v800
    %v802 = vadd.f32 %v801, 1.0
    %v803 = vmul.f32 %v802, %v738
    %805 = vrot.lane.b32.xlu0 %v801, 64
    %v806 = vpop.permute.xlu0 %805
    %v808 = vmul.f32 %v802, %v806
    %810 = vrot.lane.b32.xlu0 %v808, 32
    %v811 = vpop.permute.xlu0 %810
    %v813 = vadd.f32 %v803, %v811
    %v814 = vmul.f32 %v813, 0.5
    %v815 = vmul.f32 %v802, 0.5
    %v816 = vtanh.pop %v814
    %818 = vrot.lane.b32.xlu0 %v816, 64
    %v819 = vpop.permute.xlu0 %818
    %v821 = vmul.f32 %v815, %v819
    %823 = vrot.lane.b32.xlu0 %v821, 32
    %v824 = vpop.permute.xlu0 %823
    %s826 = scalar_lea.vmem [#allocation3], 56
    %827 = vst.msk [vmem:[%s826] sm:$0xff] %vm81, %v824
    %829 = vrot.lane.b32.xlu0 %v814, 96
    %v830 = vpop.permute.xlu0 %829
    %832 = vst.msk [vmem:[#allocation5] sm:$0xff] %vm81, %v830
    // Predicated region
    $region14: #{tpu_custom_call.1} parent=1 // pred_check
      _
    $region15: #{tpu_custom_call.1} parent=1 // pred_check_branch
      %834 = sbr.rel (0) target = $region17
    $region16: #{tpu_custom_call.1} parent=1 // pred_region
      %s836 = ssub.s32 1024, 1024
      %837 = vsyncadd [#allocation4], %s836
      %s838 = sshll.u32 [#allocation3], 4
      %s839 = int_to_ptr.vmem [resolvable:$true] %s838
      %844 = dma.vmem_to_hbm [thread:$0]  %s839, 1024, %s3, [#allocation4], 128, 128, 8
    $region17: #{tpu_custom_call.1} parent=1 // pred_fallthru
      _
    // Predicated region
    $region18: #{tpu_custom_call.1} parent=1 // pred_check
      _
    $region19: #{tpu_custom_call.1} parent=1 // pred_check_branch
      %846 = sbr.rel (0) target = $region21
    $region20: #{tpu_custom_call.1} parent=1 // pred_region
      %s848 = ssub.s32 128, 128
      %849 = vsyncadd [#allocation6], %s848
      %s851 = sshll.u32 [#allocation5], 4
      %s852 = int_to_ptr.vmem [resolvable:$true] %s851
      %854 = dma.vmem_to_hbm [thread:$0]  %s852, 128, %s4, [#allocation6]
    $region21: #{tpu_custom_call.1} parent=1 // pred_fallthru
      _
    // Predicated region
    $region22: #{tpu_custom_call.1} parent=1 // pred_check
      _
    $region23: #{tpu_custom_call.1} parent=1 // pred_check_branch
      %856 = sbr.rel (0) target = $region25
    $region24: #{tpu_custom_call.1} parent=1 // pred_region
      %857 = dma.done [#allocation4], 1024
    $region25: #{tpu_custom_call.1} parent=1 // pred_fallthru
      _
    // Predicated region
    $region26: #{tpu_custom_call.1} parent=1 // pred_check
      _
    $region27: #{tpu_custom_call.1} parent=1 // pred_check_branch
      %859 = sbr.rel (0) target = $region29
    $region28: #{tpu_custom_call.1} parent=1 // pred_region
      %860 = dma.done [#allocation6], 128
    $region29: #{tpu_custom_call.1} parent=1 // pred_fallthru
      _
    %861 = vsyncpa [#allocation4], 1
    %862 = vsyncpa [#allocation6], 1

</llo_original>
